<compile_context>
chip_gen: v6e
topology: v6e:2x2x1
jax: 0.10.0
libtpu: 0.0.40
codegen_flags: <defaults>
</compile_context>

<pallas_src>
import functools
import math

import jax
import jax.numpy as jnp
from jax.experimental import pallas as pl
from jax.experimental.pallas import tpu as pltpu


def _round_up(n, m):
    return ((n + m - 1) // m) * m


def _self_attention_kernel(x_row_ref, x_col_ref, w_qv_ref, b_qv_ref,
                           wk_ref, bk_col_ref, o_ref, q_ref, v_ref,
                           *, model_size, inv_scale):
    M = model_size
    tb = q_ref.shape[0]                       # rows (samples) in this tile

    # Fused Q/V projection for the whole batch tile: one lane-dense MXU matmul
    # (TB, M) @ (M, 2M) with f32 accumulation.  1/sqrt(head_dim) folded into q.
    qv = jnp.dot(x_row_ref[...], w_qv_ref[...],
                 preferred_element_type=jnp.float32) + b_qv_ref[...]
    q_ref[...] = qv[:, :M] * inv_scale
    v_ref[...] = qv[:, M:]

    wk = wk_ref[...]
    bk = bk_col_ref[...]

    # Per-sample outer-product attention.
    @pl.loop(0, tb)
    def _(r):
        q_row = q_ref[pl.ds(r, 1), :]                        # (1, M)
        v_row = v_ref[pl.ds(r, 1), :]                        # (1, M)
        # K projection produced directly in column orientation off the MXU,
        # so the outer product below needs no lane<->sublane relayout.
        k_col = jnp.dot(wk, x_col_ref[r],
                        preferred_element_type=jnp.float32) + bk   # (M, 1)

        # Transposed scores: rows = key j (sublanes), cols = query i (lanes).
        scores_t = k_col * q_row                             # (M, M) f32
        m = jnp.max(scores_t, axis=0, keepdims=True)         # (1, M)
        e = jnp.exp(scores_t - m)                            # (M, M)
        denom = jnp.sum(e, axis=0, keepdims=True)            # (1, M)

        # out[i] = sum_j e[j, i] * v[j] / denom[i]  -> lane-dense (1, M) row.
        unnorm = jnp.dot(v_row, e, preferred_element_type=jnp.float32)
        rcp = pl.reciprocal(denom, approx=True)              # EUP vrcp
        rcp = rcp * (2.0 - denom * rcp)                      # one Newton step
        o_ref[pl.ds(r, 1), :] = unnorm * rcp


def prepare_self_attention_params(params, compute_dtype=jnp.float32):
    """Hoisted once-per-model weight prep (do NOT rebuild per forward call).

    params: (wq, bq, wk, bk, wv, bv) in nn.Linear layout (weight (out, in)).
    compute_dtype: dtype fed to the MXU (f32, or bf16 on v5e/v6e/v7x — all
    generations have a bf16-native MXU); accumulation stays f32.
    """
    wq, bq, wk, bk, wv, bv = params
    M = wq.shape[0]
    w_qv = jnp.concatenate([wq.T, wv.T], axis=1).astype(compute_dtype)   # (M, 2M)
    b_qv = jnp.concatenate([bq, bv]).reshape(1, 2 * M).astype(jnp.float32)
    wk_c = wk.astype(compute_dtype)                                      # (M, M)
    bk_col = bk.reshape(M, 1).astype(jnp.float32)
    return w_qv, b_qv, wk_c, bk_col


def self_attention_batched(xs, prepared, num_heads, *, block_b=128):
    """Apply the module's forward independently to each row of xs: (B, M) -> (B, M)."""
    w_qv, b_qv, wk_c, bk_col = prepared
    B, M = xs.shape
    head_dim = M // num_heads
    assert head_dim * num_heads == M, "model_size must be divisible by num_heads"
    dt = w_qv.dtype                            # compute dtype chosen at prepare time

    # Batch tile size: multiple of 8 (sublanes); pad the batch to a multiple.
    tb = int(min(block_b, _round_up(B, 8)))
    tb = _round_up(tb, 8)
    Bp = _round_up(B, tb)

    xs32 = xs.astype(jnp.float32)
    if Bp != B:
        xs32 = jnp.pad(xs32, ((0, Bp - B), (0, 0)))   # zero rows are benign
    x_row = xs32.astype(dt)                    # (Bp, M)
    x_col = x_row[:, :, None]                  # (Bp, M, 1) per-sample columns

    kernel = functools.partial(_self_attention_kernel, model_size=M,
                               inv_scale=1.0 / math.sqrt(float(head_dim)))

    out = pl.pallas_call(
        kernel,
        out_shape=jax.ShapeDtypeStruct((Bp, M), jnp.float32),
        grid_spec=pltpu.PrefetchScalarGridSpec(
            num_scalar_prefetch=0,
            grid=(Bp // tb,),
            in_specs=[
                pl.BlockSpec((tb, M), lambda t: (t, 0)),         # x rows
                pl.BlockSpec((tb, M, 1), lambda t: (t, 0, 0)),   # x columns
                pl.BlockSpec((M, 2 * M), lambda t: (0, 0)),      # fused Wq|Wv (resident)
                pl.BlockSpec((1, 2 * M), lambda t: (0, 0)),      # fused bq|bv (resident)
                pl.BlockSpec((M, M), lambda t: (0, 0)),          # Wk (resident)
                pl.BlockSpec((M, 1), lambda t: (0, 0)),          # bk column (resident)
            ],
            out_specs=pl.BlockSpec((tb, M), lambda t: (t, 0)),
            scratch_shapes=[pltpu.VMEM((tb, M), jnp.float32),    # q (scaled)
                            pltpu.VMEM((tb, M), jnp.float32)],   # v
        ),
        compiler_params=pltpu.CompilerParams(
            dimension_semantics=("parallel",)),                  # megacore on v7x
    )(x_row, x_col, w_qv, b_qv, wk_c, bk_col)
    return out[:B]


def self_attention(x, prepared, num_heads):
    """Module-equivalent forward for one 1-D x of shape (model_size,)."""
    return self_attention_batched(x.reshape(1, -1), prepared, num_heads, block_b=8)[0]


def reference(x, params, num_heads):
    wq, bq, wk, bk, wv, bv = params
    head_dim = x.shape[0] // num_heads
    q = x @ wq.T + bq
    k = x @ wk.T + bk
    v = x @ wv.T + bv
    scores = (q[:, None] * k[None, :]) / jnp.sqrt(jnp.float32(head_dim))
    w = jax.nn.softmax(scores, axis=-1)
    return w @ v


def _round_bf16(t):
    return t.astype(jnp.bfloat16).astype(jnp.float32)


if __name__ == "__main__":
    num_heads, model_size, batch = 4, 32, 64     # head_dim = 8
    key = jax.random.PRNGKey(0)
    kx, kwq, kbq, kwk, kbk, kwv, kbv = jax.random.split(key, 7)

    xs = jax.random.normal(kx, (batch, model_size), jnp.float32)
    init_scale = 1.0 / math.sqrt(model_size)
    wq = jax.random.normal(kwq, (model_size, model_size), jnp.float32) * init_scale
    bq = jax.random.normal(kbq, (model_size,), jnp.float32) * 0.1
    wk = jax.random.normal(kwk, (model_size, model_size), jnp.float32) * init_scale
    bk = jax.random.normal(kbk, (model_size,), jnp.float32) * 0.1
    wv = jax.random.normal(kwv, (model_size, model_size), jnp.float32) * init_scale
    bv = jax.random.normal(kbv, (model_size,), jnp.float32) * 0.1
    params = (wq, bq, wk, bk, wv, bv)

    ref_b = jax.vmap(lambda v: reference(v, params, num_heads))(xs)

    # f32 path, batched: 2 tiles of 32 samples, "parallel" grid axis.
    prep32 = prepare_self_attention_params(params, jnp.float32)
    out_b = jax.block_until_ready(
        self_attention_batched(xs, prep32, num_heads, block_b=32))
    assert out_b.shape == (batch, model_size)
    assert jnp.allclose(out_b, ref_b, atol=5e-5, rtol=5e-5), "f32 batched mismatch"

    # Module-equivalent single-vector forward (the original 1-D API).
    out1 = jax.block_until_ready(self_attention(xs[0], prep32, num_heads))
    assert out1.shape == (model_size,)
    assert jnp.allclose(out1, ref_b[0], atol=5e-5, rtol=5e-5), "f32 single mismatch"

    # bf16 weight/x path (MXU-native on v5e/v6e/v7x), f32 accumulation.
    prep_bf = prepare_self_attention_params(params, jnp.bfloat16)
    out_bf = jax.block_until_ready(
        self_attention_batched(xs, prep_bf, num_heads, block_b=32))
    params_bf = (_round_bf16(wq), bq, _round_bf16(wk), bk, _round_bf16(wv), bv)
    ref_bf = jax.vmap(lambda v: reference(v, params_bf, num_heads))(_round_bf16(xs))
    assert jnp.allclose(out_bf, ref_bf, atol=1e-3, rtol=1e-3), "bf16 mismatch"

    print("KERNEL_OK")
</pallas_src>

<mosaic_0001>
module attributes {stable_mosaic.version = 11 : i64} {
  func.func @_self_attention_kernel(%arg0: i32, %arg1: memref<32x32xf32, #tpu.memory_space<vmem>>, %arg2: memref<32x32x1xf32, #tpu.memory_space<vmem>>, %arg3: memref<32x64xf32, #tpu.memory_space<vmem>>, %arg4: memref<1x64xf32, #tpu.memory_space<vmem>>, %arg5: memref<32x32xf32, #tpu.memory_space<vmem>>, %arg6: memref<32x1xf32, #tpu.memory_space<vmem>>, %arg7: memref<32x32xf32, #tpu.memory_space<vmem>>, %arg8: memref<32x32xf32, #tpu.memory_space<vmem>>, %arg9: memref<32x32xf32, #tpu.memory_space<vmem>>) attributes {dimension_semantics = [#tpu.dimension_semantics<parallel>], iteration_bounds = array<i64: 2>, scalar_prefetch = 0 : i64, scratch_operands = 2 : i64, tpu.core_type = #tpu.core_type<tc>, window_params = [{transform_indices = @transform_0, window_bounds = array<i64: 32, 32>}, {transform_indices = @transform_1, window_bounds = array<i64: 32, 32, 1>}, {pipeline_mode = #tpu.pipeline_mode<synchronous>, transform_indices = @transform_2, window_bounds = array<i64: 32, 64>}, {pipeline_mode = #tpu.pipeline_mode<synchronous>, transform_indices = @transform_3, window_bounds = array<i64: 1, 64>}, {pipeline_mode = #tpu.pipeline_mode<synchronous>, transform_indices = @transform_4, window_bounds = array<i64: 32, 32>}, {pipeline_mode = #tpu.pipeline_mode<synchronous>, transform_indices = @transform_5, window_bounds = array<i64: 32, 1>}, {transform_indices = @transform_6, window_bounds = array<i64: 32, 32>}]} {
    %c0 = arith.constant 0 : index
    %c0_0 = arith.constant 0 : index
    %0 = vector.load %arg1[%c0, %c0_0] : memref<32x32xf32, #tpu.memory_space<vmem>>, vector<32x32xf32>
    %c0_1 = arith.constant 0 : index
    %c0_2 = arith.constant 0 : index
    %1 = vector.load %arg3[%c0_1, %c0_2] : memref<32x64xf32, #tpu.memory_space<vmem>>, vector<32x64xf32>
    %cst = arith.constant dense<0.000000e+00> : vector<32x64xf32>
    %2 = tpu.matmul %0, %1, %cst {dimension_numbers = #tpu.dot_dimension_numbers<[1], [0], [0], [1], [0, 0, 1, 1], [], []>} : vector<32x32xf32>, vector<32x64xf32>, vector<32x64xf32> -> vector<32x64xf32>
    %c0_3 = arith.constant 0 : index
    %c0_4 = arith.constant 0 : index
    %3 = vector.load %arg4[%c0_3, %c0_4] : memref<1x64xf32, #tpu.memory_space<vmem>>, vector<1x64xf32>
    %4 = vector.broadcast %3 : vector<1x64xf32> to vector<32x64xf32>
    %5 = arith.addf %2, %4 : vector<32x64xf32>
    %6 = vector.extract_strided_slice %5 {offsets = [0, 0], sizes = [32, 32], strides = [1, 1]} : vector<32x64xf32> to vector<32x32xf32>
    %cst_5 = arith.constant 0.353553385 : f32
    %7 = vector.broadcast %cst_5 : f32 to vector<32x32xf32>
    %8 = arith.mulf %6, %7 : vector<32x32xf32>
    %c0_6 = arith.constant 0 : index
    %c0_7 = arith.constant 0 : index
    %9 = vector.load %arg8[%c0_6, %c0_7] : memref<32x32xf32, #tpu.memory_space<vmem>>, vector<32x32xf32>
    tpu.vector_store %arg8[%c0_6, %c0_7], %8 {strides = array<i32>} : memref<32x32xf32, #tpu.memory_space<vmem>>, vector<32x32xf32>,
    %10 = vector.extract_strided_slice %5 {offsets = [0, 32], sizes = [32, 32], strides = [1, 1]} : vector<32x64xf32> to vector<32x32xf32>
    %c0_8 = arith.constant 0 : index
    %c0_9 = arith.constant 0 : index
    %11 = vector.load %arg9[%c0_8, %c0_9] : memref<32x32xf32, #tpu.memory_space<vmem>>, vector<32x32xf32>
    tpu.vector_store %arg9[%c0_8, %c0_9], %10 {strides = array<i32>} : memref<32x32xf32, #tpu.memory_space<vmem>>, vector<32x32xf32>,
    %c0_10 = arith.constant 0 : index
    %c0_11 = arith.constant 0 : index
    %12 = vector.load %arg5[%c0_10, %c0_11] : memref<32x32xf32, #tpu.memory_space<vmem>>, vector<32x32xf32>
    %c0_12 = arith.constant 0 : index
    %c0_13 = arith.constant 0 : index
    %13 = vector.load %arg6[%c0_12, %c0_13] : memref<32x1xf32, #tpu.memory_space<vmem>>, vector<32x1xf32>
    %c0_i32 = arith.constant 0 : i32
    %c32_i32 = arith.constant 32 : i32
    %14 = arith.addi %c0_i32, %c32_i32 : i32
    %c1_i32 = arith.constant 1 : i32
    scf.for %arg10 = %c0_i32 to %14 step %c1_i32  : i32 {
      %c1_i32_15 = arith.constant 1 : i32
      %15 = arith.muli %arg10, %c1_i32_15 : i32
      %c0_i32_16 = arith.constant 0 : i32
      %16 = arith.addi %c0_i32_16, %15 : i32
      %17 = arith.index_cast %16 : i32 to index
      %c0_17 = arith.constant 0 : index
      %18 = vector.load %arg8[%17, %c0_17] : memref<32x32xf32, #tpu.memory_space<vmem>>, vector<1x32xf32>
      %19 = arith.index_cast %16 : i32 to index
      %c0_18 = arith.constant 0 : index
      %20 = vector.load %arg9[%19, %c0_18] : memref<32x32xf32, #tpu.memory_space<vmem>>, vector<1x32xf32>
      %21 = arith.index_cast %16 : i32 to index
      %c0_19 = arith.constant 0 : index
      %c0_20 = arith.constant 0 : index
      %22 = vector.load %arg2[%21, %c0_19, %c0_20] : memref<32x32x1xf32, #tpu.memory_space<vmem>>, vector<1x32x1xf32>
      %23 = vector.shape_cast %22 : vector<1x32x1xf32> to vector<32x1xf32>
      %cst_21 = arith.constant dense<0.000000e+00> : vector<32x1xf32>
      %24 = tpu.matmul %12, %23, %cst_21 {dimension_numbers = #tpu.dot_dimension_numbers<[1], [0], [0], [1], [0, 0, 1, 1], [], []>} : vector<32x32xf32>, vector<32x1xf32>, vector<32x1xf32> -> vector<32x1xf32>
      %25 = arith.addf %24, %13 : vector<32x1xf32>
      %26 = vector.broadcast %25 : vector<32x1xf32> to vector<32x32xf32>
      %27 = vector.broadcast %18 : vector<1x32xf32> to vector<32x32xf32>
      %28 = arith.mulf %26, %27 : vector<32x32xf32>
      %cst_22 = arith.constant dense<0xFF800000> : vector<32xf32>
      %29 = vector.multi_reduction <maximumf>, %28, %cst_22 [0] : vector<32x32xf32> to vector<32xf32>
      %30 = vector.shape_cast %29 : vector<32xf32> to vector<1x32xf32>
      %31 = vector.broadcast %30 : vector<1x32xf32> to vector<32x32xf32>
      %32 = arith.subf %28, %31 : vector<32x32xf32>
      %33 = math.exp %32 : vector<32x32xf32>
      %cst_23 = arith.constant dense<0.000000e+00> : vector<32xf32>
      %34 = vector.multi_reduction <add>, %33, %cst_23 [0] : vector<32x32xf32> to vector<32xf32>
      %35 = vector.shape_cast %34 : vector<32xf32> to vector<1x32xf32>
      %cst_24 = arith.constant dense<0.000000e+00> : vector<1x32xf32>
      %36 = tpu.matmul %20, %33, %cst_24 {dimension_numbers = #tpu.dot_dimension_numbers<[1], [0], [0], [1], [0, 0, 1, 1], [], []>} : vector<1x32xf32>, vector<32x32xf32>, vector<1x32xf32> -> vector<1x32xf32>
      %37 = tpu.reciprocal %35 {approx = true} : vector<1x32xf32> -> vector<1x32xf32>
      %38 = arith.mulf %35, %37 : vector<1x32xf32>
      %cst_25 = arith.constant 2.000000e+00 : f32
      %39 = vector.broadcast %cst_25 : f32 to vector<1x32xf32>
      %40 = arith.subf %39, %38 : vector<1x32xf32>
      %41 = arith.mulf %37, %40 : vector<1x32xf32>
      %42 = arith.mulf %36, %41 : vector<1x32xf32>
      %43 = arith.index_cast %16 : i32 to index
      %c0_26 = arith.constant 0 : index
      %44 = vector.load %arg7[%43, %c0_26] : memref<32x32xf32, #tpu.memory_space<vmem>>, vector<1x32xf32>
      tpu.vector_store %arg7[%43, %c0_26], %42 {strides = array<i32>} : memref<32x32xf32, #tpu.memory_space<vmem>>, vector<1x32xf32>,
    }
    %c32_i32_14 = arith.constant 32 : i32
    return
  }
  func.func @transform_0(%arg0: i32) -> (i32, i32) {
    %c0_i32 = arith.constant 0 : i32
    %c0_i32_0 = arith.constant 0 : i32
    return %arg0, %c0_i32 : i32, i32
  }
  func.func @transform_1(%arg0: i32) -> (i32, i32, i32) {
    %c0_i32 = arith.constant 0 : i32
    %c0_i32_0 = arith.constant 0 : i32
    %c0_i32_1 = arith.constant 0 : i32
    return %arg0, %c0_i32, %c0_i32_0 : i32, i32, i32
  }
  func.func @transform_2(%arg0: i32) -> (i32, i32) {
    %c0_i32 = arith.constant 0 : i32
    %c0_i32_0 = arith.constant 0 : i32
    %c0_i32_1 = arith.constant 0 : i32
    return %c0_i32, %c0_i32_0 : i32, i32
  }
  func.func @transform_3(%arg0: i32) -> (i32, i32) {
    %c0_i32 = arith.constant 0 : i32
    %c0_i32_0 = arith.constant 0 : i32
    %c0_i32_1 = arith.constant 0 : i32
    return %c0_i32, %c0_i32_0 : i32, i32
  }
  func.func @transform_4(%arg0: i32) -> (i32, i32) {
    %c0_i32 = arith.constant 0 : i32
    %c0_i32_0 = arith.constant 0 : i32
    %c0_i32_1 = arith.constant 0 : i32
    return %c0_i32, %c0_i32_0 : i32, i32
  }
  func.func @transform_5(%arg0: i32) -> (i32, i32) {
    %c0_i32 = arith.constant 0 : i32
    %c0_i32_0 = arith.constant 0 : i32
    %c0_i32_1 = arith.constant 0 : i32
    return %c0_i32, %c0_i32_0 : i32, i32
  }
  func.func @transform_6(%arg0: i32) -> (i32, i32) {
    %c0_i32 = arith.constant 0 : i32
    %c0_i32_0 = arith.constant 0 : i32
    return %arg0, %c0_i32 : i32, i32
  }
}

</mosaic_0001>

<llo_original>
// kernel: tpu_custom_call.1
$region0: #{tpu_custom_call.1}
  #allocation0 [shape = 'u32[]', space=smem, size = 0x4, offset = 0x4, fixed_abs, tag = 'smem constant byte address 0x4 - core index']
  #allocation1 [shape = 'u32[144,128]{1,0:T(1,128)}', space=vmem, size = 0x12000, scoped, tag = 'internal scratch']
  #allocation2 [shape = 'f32[32,32]{1,0:T(8,128)}', space=vmem, size = 0x4000, scoped, tag = 'scratch operand']
  #allocation3 [shape = 'f32[32,32]{1,0:T(8,128)}', space=vmem, size = 0x4000, scoped, tag = 'scratch operand']
  %s0 = inlined_call_operand.vmem [shape: f32[64,32], index: 0, kind: input, shape index: {}]
  %s1 = inlined_call_operand.vmem [shape: f32[64,32,1], index: 1, kind: input, shape index: {}]
  %s2 = inlined_call_operand.vmem [shape: f32[32,64], index: 2, kind: input, shape index: {}]
  %s3 = inlined_call_operand.vmem [shape: f32[1,64], index: 3, kind: input, shape index: {}]
  %s4 = inlined_call_operand.vmem [shape: f32[32,32], index: 4, kind: input, shape index: {}]
  %s5 = inlined_call_operand.vmem [shape: f32[32,1], index: 5, kind: input, shape index: {}]
  %s6 = inlined_call_operand.vmem [shape: f32[64,32], index: 6, kind: output, shape index: {}]
  %s7 = sld [smem:[#allocation0]]
  $region64: #{tpu_custom_call.1} parent=0
    _
  %s9 = ssub.s32 1, %s7
  %s10 = scalar_select 0, %s9, %s7
  loop: start=0, step=1, limit=4
  $region2: #{tpu_custom_call.1} parent=0 // loop_pre_header
    _
  $region3: #{tpu_custom_call.1} parent=0 // loop_header
    %s12 = sphi 0, %s16
    %p13 = scmp.ge.s32.totalorder %s12, 4
    %s22 = sphi 0, %s24
    %s25 = sphi 0, %s22
    %s26 = sphi 0, %s25
    %s42 = sphi 0, %s26
    %s48 = sphi 0, %s50
    %s51 = sphi 0, %s48
    %s52 = sphi 0, %s51
    %s68 = sphi 0, %s52
    %s72 = sphi 0, %s72
    %s74 = sphi 0, %s72
    %s75 = sphi 0, %s74
    %s89 = sphi 0, %s75
    %s93 = sphi 0, %s93
    %s95 = sphi 0, %s93
    %s96 = sphi 0, %s95
    %s110 = sphi 0, %s96
    %s114 = sphi 0, %s114
    %s116 = sphi 0, %s114
    %s117 = sphi 0, %s116
    %s131 = sphi 0, %s117
    %s135 = sphi 0, %s135
    %s137 = sphi 0, %s135
    %s138 = sphi 0, %s137
    %s152 = sphi 0, %s138
    %s158 = sphi 0, %s160
    %s161 = sphi 0, %s158
    %s162 = sphi 0, %s161
    %s178 = sphi 0, %s162
  $region4: #{tpu_custom_call.1} parent=0 // loop_header_branch
    %15 = sbr.rel (%p13) target = $region8
  $region5: #{tpu_custom_call.1} parent=0 // loop_body
    %s17 = ssub.s32 %s12, 1
    %s18 = ssub.s32 %s12, 2
    %s19 = sadd.s32 %s12, 1
    %s20 = ssub.s32 %s12, %s19
    %p21 = scmp.eq.s32.totalorder %s20, 0
    %s23 = sadd.s32 %s22, 1
    %s24 = scalar_select %p21, %s22, %s23
    %p27 = pneg %p21
    %p28 = scmp.eq.s32.totalorder %s12, 1
    %p29 = por %p27, %p28
    %p30 = scmp.ne.s32.totalorder %s22, %s25
    %p31 = scmp.eq.s32.totalorder %s12, 0
    %p32 = por %p30, %p31
    %p33 = scmp.ne.s32.totalorder %s22, %s25
    %p34 = scmp.eq.s32.totalorder %s17, 1
    %p35 = por %p33, %p34
    %p36 = scmp.ne.s32.totalorder %s25, %s26
    %p37 = scmp.eq.s32.totalorder %s17, 0
    %p38 = por %p36, %p37
    %p39 = scmp.ne.s32.totalorder %s25, %s26
    %p40 = scmp.eq.s32.totalorder %s18, 1
    %p41 = por %p39, %p40
    %p43 = scmp.ne.s32.totalorder %s26, %s42
    %p44 = scmp.eq.s32.totalorder %s18, 0
    %p45 = por %p43, %p44
    %s46 = ssub.s32 %s12, %s19
    %p47 = scmp.eq.s32.totalorder %s46, 0
    %s49 = sadd.s32 %s48, 1
    %s50 = scalar_select %p47, %s48, %s49
    %p53 = pneg %p47
    %p54 = scmp.eq.s32.totalorder %s12, 1
    %p55 = por %p53, %p54
    %p56 = scmp.ne.s32.totalorder %s48, %s51
    %p57 = scmp.eq.s32.totalorder %s12, 0
    %p58 = por %p56, %p57
    %p59 = scmp.ne.s32.totalorder %s48, %s51
    %p60 = scmp.eq.s32.totalorder %s17, 1
    %p61 = por %p59, %p60
    %p62 = scmp.ne.s32.totalorder %s51, %s52
    %p63 = scmp.eq.s32.totalorder %s17, 0
    %p64 = por %p62, %p63
    %p65 = scmp.ne.s32.totalorder %s51, %s52
    %p66 = scmp.eq.s32.totalorder %s18, 1
    %p67 = por %p65, %p66
    %p69 = scmp.ne.s32.totalorder %s52, %s68
    %p70 = scmp.eq.s32.totalorder %s18, 0
    %p71 = por %p69, %p70
    %s73 = sadd.s32 %s72, 1
    %p76 = scmp.eq.s32.totalorder %s12, 1
    %p77 = scmp.ne.s32.totalorder %s72, %s74
    %p78 = scmp.eq.s32.totalorder %s12, 0
    %p79 = por %p77, %p78
    %p80 = scmp.ne.s32.totalorder %s72, %s74
    %p81 = scmp.eq.s32.totalorder %s17, 1
    %p82 = por %p80, %p81
    %p83 = scmp.ne.s32.totalorder %s74, %s75
    %p84 = scmp.eq.s32.totalorder %s17, 0
    %p85 = por %p83, %p84
    %p86 = scmp.ne.s32.totalorder %s74, %s75
    %p87 = scmp.eq.s32.totalorder %s18, 1
    %p88 = por %p86, %p87
    %p90 = scmp.ne.s32.totalorder %s75, %s89
    %p91 = scmp.eq.s32.totalorder %s18, 0
    %p92 = por %p90, %p91
    %s94 = sadd.s32 %s93, 1
    %p97 = scmp.eq.s32.totalorder %s12, 1
    %p98 = scmp.ne.s32.totalorder %s93, %s95
    %p99 = scmp.eq.s32.totalorder %s12, 0
    %p100 = por %p98, %p99
    %p101 = scmp.ne.s32.totalorder %s93, %s95
    %p102 = scmp.eq.s32.totalorder %s17, 1
    %p103 = por %p101, %p102
    %p104 = scmp.ne.s32.totalorder %s95, %s96
    %p105 = scmp.eq.s32.totalorder %s17, 0
    %p106 = por %p104, %p105
    %p107 = scmp.ne.s32.totalorder %s95, %s96
    %p108 = scmp.eq.s32.totalorder %s18, 1
    %p109 = por %p107, %p108
    %p111 = scmp.ne.s32.totalorder %s96, %s110
    %p112 = scmp.eq.s32.totalorder %s18, 0
    %p113 = por %p111, %p112
    %s115 = sadd.s32 %s114, 1
    %p118 = scmp.eq.s32.totalorder %s12, 1
    %p119 = scmp.ne.s32.totalorder %s114, %s116
    %p120 = scmp.eq.s32.totalorder %s12, 0
    %p121 = por %p119, %p120
    %p122 = scmp.ne.s32.totalorder %s114, %s116
    %p123 = scmp.eq.s32.totalorder %s17, 1
    %p124 = por %p122, %p123
    %p125 = scmp.ne.s32.totalorder %s116, %s117
    %p126 = scmp.eq.s32.totalorder %s17, 0
    %p127 = por %p125, %p126
    %p128 = scmp.ne.s32.totalorder %s116, %s117
    %p129 = scmp.eq.s32.totalorder %s18, 1
    %p130 = por %p128, %p129
    %p132 = scmp.ne.s32.totalorder %s117, %s131
    %p133 = scmp.eq.s32.totalorder %s18, 0
    %p134 = por %p132, %p133
    %s136 = sadd.s32 %s135, 1
    %p139 = scmp.eq.s32.totalorder %s12, 1
    %p140 = scmp.ne.s32.totalorder %s135, %s137
    %p141 = scmp.eq.s32.totalorder %s12, 0
    %p142 = por %p140, %p141
    %p143 = scmp.ne.s32.totalorder %s135, %s137
    %p144 = scmp.eq.s32.totalorder %s17, 1
    %p145 = por %p143, %p144
    %p146 = scmp.ne.s32.totalorder %s137, %s138
    %p147 = scmp.eq.s32.totalorder %s17, 0
    %p148 = por %p146, %p147
    %p149 = scmp.ne.s32.totalorder %s137, %s138
    %p150 = scmp.eq.s32.totalorder %s18, 1
    %p151 = por %p149, %p150
    %p153 = scmp.ne.s32.totalorder %s138, %s152
    %p154 = scmp.eq.s32.totalorder %s18, 0
    %p155 = por %p153, %p154
    %s156 = ssub.s32 %s12, %s19
    %p157 = scmp.eq.s32.totalorder %s156, 0
    %s159 = sadd.s32 %s158, 1
    %s160 = scalar_select %p157, %s158, %s159
    %p163 = pneg %p157
    %p164 = scmp.eq.s32.totalorder %s12, 1
    %p165 = por %p163, %p164
    %p166 = scmp.ne.s32.totalorder %s158, %s161
    %p167 = scmp.eq.s32.totalorder %s12, 0
    %p168 = por %p166, %p167
    %p169 = scmp.ne.s32.totalorder %s158, %s161
    %p170 = scmp.eq.s32.totalorder %s17, 1
    %p171 = por %p169, %p170
    %p172 = scmp.ne.s32.totalorder %s161, %s162
    %p173 = scmp.eq.s32.totalorder %s17, 0
    %p174 = por %p172, %p173
    %p175 = scmp.ne.s32.totalorder %s161, %s162
    %p176 = scmp.eq.s32.totalorder %s18, 1
    %p177 = por %p175, %p176
    %p179 = scmp.ne.s32.totalorder %s162, %s178
    %p180 = scmp.eq.s32.totalorder %s18, 0
    %p181 = por %p179, %p180
    %p182 = scmp.le.s32.totalorder 1, %s12
    %p183 = scmp.lt.s32.totalorder %s12, 3
    %p184 = pnand %p182, %p183
    %p185 = pneg %p184
    // Predicated region
    $region9: #{tpu_custom_call.1} parent=5 // pred_check
      _
    $region10: #{tpu_custom_call.1} parent=5 // pred_check_branch
      %187 = sbr.rel (%p184) target = $region12
    $region11: #{tpu_custom_call.1} parent=5 // pred_region
      %s188 = ssub.s32 %s12, 1
      // Predicated region
      $region13: #{tpu_custom_call.1} parent=11 // pred_check
        %p189 = pneg %p85
      $region14: #{tpu_custom_call.1} parent=11 // pred_check_branch
        %191 = sbr.rel (%p189) target = $region16
      $region15: #{tpu_custom_call.1} parent=11 // pred_region
        _
      $region16: #{tpu_custom_call.1} parent=11 // pred_fallthru
        _
      // Predicated region
      $region17: #{tpu_custom_call.1} parent=11 // pred_check
        %p192 = pneg %p106
      $region18: #{tpu_custom_call.1} parent=11 // pred_check_branch
        %194 = sbr.rel (%p192) target = $region20
      $region19: #{tpu_custom_call.1} parent=11 // pred_region
        _
      $region20: #{tpu_custom_call.1} parent=11 // pred_fallthru
        _
      // Predicated region
      $region21: #{tpu_custom_call.1} parent=11 // pred_check
        %p195 = pneg %p127
      $region22: #{tpu_custom_call.1} parent=11 // pred_check_branch
        %197 = sbr.rel (%p195) target = $region24
      $region23: #{tpu_custom_call.1} parent=11 // pred_region
        _
      $region24: #{tpu_custom_call.1} parent=11 // pred_fallthru
        _
      // Predicated region
      $region25: #{tpu_custom_call.1} parent=11 // pred_check
        %p198 = pneg %p148
      $region26: #{tpu_custom_call.1} parent=11 // pred_check_branch
        %200 = sbr.rel (%p198) target = $region28
      $region27: #{tpu_custom_call.1} parent=11 // pred_region
        _
      $region28: #{tpu_custom_call.1} parent=11 // pred_fallthru
        _
    $region12: #{tpu_custom_call.1} parent=5 // pred_fallthru
      _
    %p201 = scmp.lt.s32.totalorder %s12, 2
    // Predicated region
    $region29: #{tpu_custom_call.1} parent=5 // pred_check
      %p202 = pneg %p201
    $region30: #{tpu_custom_call.1} parent=5 // pred_check_branch
      %204 = sbr.rel (%p202) target = $region32
    $region31: #{tpu_custom_call.1} parent=5 // pred_region
      // Predicated region
      $region33: #{tpu_custom_call.1} parent=31 // pred_check
        %p205 = pneg %p32
      $region34: #{tpu_custom_call.1} parent=31 // pred_check_branch
        %207 = sbr.rel (%p205) target = $region36
      $region35: #{tpu_custom_call.1} parent=31 // pred_region
        %s208 = smul.u32 4, %s12
        %p209 = scmp.lt.s32.totalorder %s208, 7
        %s210 = scalar_select %p209, %s208, 7
        %s211 = smul.addr %s210, 8
        %s212 = scalar_lea.vmem %s0, %s211
        %s213 = smul.u32 4, %s12
      $region36: #{tpu_custom_call.1} parent=31 // pred_fallthru
        _
      // Predicated region
      $region37: #{tpu_custom_call.1} parent=31 // pred_check
        %p214 = pneg %p58
      $region38: #{tpu_custom_call.1} parent=31 // pred_check_branch
        %216 = sbr.rel (%p214) target = $region40
      $region39: #{tpu_custom_call.1} parent=31 // pred_region
        %s217 = smul.u32 32, %s12
        %p218 = scmp.lt.s32.totalorder %s217, 63
        %s219 = scalar_select %p218, %s217, 63
        %s220 = smul.addr %s219, 4
        %s221 = smul.addr %s220, 8
        %s222 = scalar_lea.vmem %s1, %s221
        %s223 = smul.u32 32, %s12
      $region40: #{tpu_custom_call.1} parent=31 // pred_fallthru
        _
    $region32: #{tpu_custom_call.1} parent=5 // pred_fallthru
      _
    %p224 = scmp.le.s32.totalorder 1, %s12
    %p225 = scmp.lt.s32.totalorder %s12, 3
    %p226 = pnand %p224, %p225
    %p227 = pneg %p226
    // Predicated region
    $region41: #{tpu_custom_call.1} parent=5 // pred_check
      _
    $region42: #{tpu_custom_call.1} parent=5 // pred_check_branch
      %229 = sbr.rel (%p226) target = $region44
    $region43: #{tpu_custom_call.1} parent=5 // pred_region
      %s230 = ssub.s32 %s12, 1
      %s231 = smul.u32 4, %s17
      %p232 = scmp.lt.s32.totalorder %s231, 7
      %s233 = scalar_select %p232, %s231, 7
      %s234 = smul.addr %s233, 8
      %s235 = scalar_lea.vmem %s0, %s234
      %p236 = pneg %p38
      %p237 = pneg %p35
      %s238 = smul.u32 32, %s17
      %p239 = scmp.lt.s32.totalorder %s238, 63
      %s240 = scalar_select %p239, %s238, 63
      %s241 = smul.addr %s240, 4
      %s242 = smul.addr %s241, 8
      %s243 = scalar_lea.vmem %s1, %s242
      %p244 = pneg %p64
      %p245 = pneg %p61
      %p246 = pneg %p85
      %p247 = pneg %p82
      %p248 = pneg %p106
      %p249 = pneg %p103
      %p250 = pneg %p127
      %p251 = pneg %p124
      %p252 = pneg %p148
      %p253 = pneg %p145
      %p254 = pneg %p174
      %p255 = pneg %p171
      %s256 = smul.u32 4, %s17
      %p257 = scmp.lt.s32.totalorder %s256, 7
      %s258 = scalar_select %p257, %s256, 7
      %s259 = smul.addr %s258, 8
      %s260 = scalar_lea.vmem %s6, %s259
      %s261 = smul.u32 4, %s17
      %p262 = scmp.lt.s32.totalorder %s261, 7
      %s263 = scalar_select %p262, %s261, 7
      %s264 = smul.addr %s263, 8
      %s265 = scalar_lea.vmem %s0, %s264
      %s266 = smul.u32 4, %s17
      %s267 = smul.u32 32, %s17
      %p268 = scmp.lt.s32.totalorder %s267, 63
      %s269 = scalar_select %p268, %s267, 63
      %s270 = smul.addr %s269, 4
      %s271 = smul.addr %s270, 8
      %s272 = scalar_lea.vmem %s1, %s271
      %s273 = smul.u32 32, %s17
      %s274 = smul.u32 4, %s17
      %p275 = scmp.lt.s32.totalorder %s274, 7
      %s276 = scalar_select %p275, %s274, 7
      %s277 = smul.addr %s276, 8
      %s278 = scalar_lea.vmem %s6, %s277
      %s279 = smul.u32 4, %s17
      %v280 = vld [vmem:[%s265] sm:$0xff]
      %v281 = vld [vmem:[%s265 + $0x8] sm:$0xff]
      %v282 = vld [vmem:[%s265 + $0x10] sm:$0xff]
      %v283 = vld [vmem:[%s265 + $0x18] sm:$0xff]
      %v284 = vld [vmem:[%s2] sm:$0xff]
      %v285 = vld [vmem:[%s2 + $0x8] sm:$0xff]
      %v286 = vld [vmem:[%s2 + $0x10] sm:$0xff]
      %v287 = vld [vmem:[%s2 + $0x18] sm:$0xff]
      %v288 = vld [vmem:[%s3] sm:$0x1]
      %v290 = vlaneseq
      %v291 = vshrl.u32 %v290, 7
      %v292 = vsub.s32 0, %v291
      %v293 = vrot.slane %v288, %v292
      %vm295 = vcmask 261120
      %v297 = vsel %vm295, %v280, 0
      %v300 = vsel %vm295, %v281, 0
      %v303 = vsel %vm295, %v282, 0
      %v306 = vsel %vm295, %v283, 0
      %308 = vmatprep.subr.mxu0 0.0
      %309 = vmatpush1.msra.mxu0 0.0
      %310 = vmatprep.subr.mxu0 0.0
      %311 = vmatpush1.msra.mxu0 0.0
      %312 = vmatprep.subr.mxu0 0.0
      %313 = vmatpush1.msra.mxu0 0.0
      %314 = vmatprep.subr.mxu0 0.0
      %315 = vmatpush1.msra.mxu0 0.0
      %316 = vmatprep.subr.mxu0 0.0
      %317 = vmatpush1.msra.mxu0 0.0
      %318 = vmatprep.subr.mxu0 0.0
      %319 = vmatpush1.msra.mxu0 0.0
      %320 = vmatprep.subr.mxu0 0.0
      %321 = vmatpush1.msra.mxu0 0.0
      %322 = vmatprep.subr.mxu0 0.0
      %323 = vmatpush1.msra.mxu0 0.0
      %324 = vmatprep.subr.mxu0 0.0
      %325 = vmatpush1.msra.mxu0 0.0
      %326 = vmatprep.subr.mxu0 0.0
      %327 = vmatpush1.msra.mxu0 0.0
      %328 = vmatprep.subr.mxu0 0.0
      %329 = vmatpush1.msra.mxu0 0.0
      %330 = vmatprep.subr.mxu0 0.0
      %331 = vmatpush1.msra.mxu0 0.0
      %332 = vmatprep.subr.mxu0 0.0
      %333 = vmatpush1.msra.mxu0 %v287
      %334 = vmatprep.subr.mxu0 0.0
      %335 = vmatpush1.msra.mxu0 %v286
      %336 = vmatprep.subr.mxu0 0.0
      %337 = vmatpush1.msra.mxu0 %v285
      %338 = vmatprep.subr.mxu0 0.0
      %339 = vmatpush1.msra.mxu0 %v284
      %340 = vmatprep.subr.mxu0 0.0
      %341 = vmatpush2.msra.mxu0 0.0
      %342 = vmatprep.subr.mxu0 0.0
      %343 = vmatpush2.msra.mxu0 0.0
      %344 = vmatprep.subr.mxu0 0.0
      %345 = vmatpush2.msra.mxu0 0.0
      %346 = vmatprep.subr.mxu0 0.0
      %347 = vmatpush2.msra.mxu0 0.0
      %348 = vmatprep.subr.mxu0 0.0
      %349 = vmatpush2.msra.mxu0 0.0
      %350 = vmatprep.subr.mxu0 0.0
      %351 = vmatpush2.msra.mxu0 0.0
      %352 = vmatprep.subr.mxu0 0.0
      %353 = vmatpush2.msra.mxu0 0.0
      %354 = vmatprep.subr.mxu0 0.0
      %355 = vmatpush2.msra.mxu0 0.0
      %356 = vmatprep.subr.mxu0 0.0
      %357 = vmatpush2.msra.mxu0 0.0
      %358 = vmatprep.subr.mxu0 0.0
      %359 = vmatpush2.msra.mxu0 0.0
      %360 = vmatprep.subr.mxu0 0.0
      %361 = vmatpush2.msra.mxu0 0.0
      %362 = vmatprep.subr.mxu0 0.0
      %363 = vmatpush2.msra.mxu0 0.0
      %364 = vmatprep.subr.mxu0 0.0
      %365 = vmatpush2.msra.mxu0 0.0
      %366 = vmatprep.subr.mxu0 0.0
      %367 = vmatpush2.msra.mxu0 0.0
      %368 = vmatprep.subr.mxu0 0.0
      %369 = vmatpush2.msra.mxu0 0.0
      %370 = vmatprep.subr.mxu0 0.0
      %371 = vmatpush2.msra.mxu0 0.0
      %372 = vmatprep.mubr.f32.mxu0 0.0
      %373 = vmatmul.mubr.f32.gmra.mxu0 %v297
      %v374 = vpop.f32.mrf.mxu0
      %v375 = vadd.f32 %v293, %v374
      %v376 = vpop.f32.mrf.mxu0
      %377 = vmatprep.mubr.f32.mxu0 0.0
      %378 = vmatmul.mubr.f32.gmra.mxu0 %v300
      %v379 = vpop.f32.mrf.mxu0
      %v380 = vadd.f32 %v293, %v379
      %v381 = vpop.f32.mrf.mxu0
      %382 = vmatprep.mubr.f32.mxu0 0.0
      %383 = vmatmul.mubr.f32.gmra.mxu0 %v303
      %v384 = vpop.f32.mrf.mxu0
      %v385 = vadd.f32 %v293, %v384
      %v386 = vpop.f32.mrf.mxu0
      %387 = vmatprep.mubr.f32.mxu0 0.0
      %388 = vmatmul.mubr.f32.gmra.mxu0 %v306
      %v389 = vpop.f32.mrf.mxu0
      %v390 = vadd.f32 %v293, %v389
      %v391 = vpop.f32.mrf.mxu0
      %392 = vdwg.mxu0
      %v393 = vmul.f32 %v375, 0.35355338
      %v394 = vmul.f32 %v380, 0.35355338
      %v395 = vmul.f32 %v385, 0.35355338
      %v396 = vmul.f32 %v390, 0.35355338
      %397 = vst.msk [vmem:[#allocation2] sm:$0xff] %vm295, %v393
      %398 = vst.msk [vmem:[#allocation2 + $0x8] sm:$0xff] %vm295, %v394
      %399 = vst.msk [vmem:[#allocation2 + $0x10] sm:$0xff] %vm295, %v395
      %400 = vst.msk [vmem:[#allocation2 + $0x18] sm:$0xff] %vm295, %v396
      %405 = vrot.lane.b32.xlu0 %v375, 96
      %v406 = vpop.permute.xlu0 %405
      %407 = vrot.lane.b32.xlu0 %v380, 96
      %v408 = vpop.permute.xlu0 %407
      %409 = vrot.lane.b32.xlu0 %v385, 96
      %v410 = vpop.permute.xlu0 %409
      %411 = vrot.lane.b32.xlu0 %v390, 96
      %v412 = vpop.permute.xlu0 %411
      %417 = vst.msk [vmem:[#allocation3] sm:$0xff] %vm295, %v406
      %418 = vst.msk [vmem:[#allocation3 + $0x8] sm:$0xff] %vm295, %v408
      %419 = vst.msk [vmem:[#allocation3 + $0x10] sm:$0xff] %vm295, %v410
      %420 = vst.msk [vmem:[#allocation3 + $0x18] sm:$0xff] %vm295, %v412
      %v421 = vld [vmem:[%s4] sm:$0xff]
      %v422 = vld [vmem:[%s4 + $0x8] sm:$0xff]
      %v423 = vld [vmem:[%s4 + $0x10] sm:$0xff]
      %v424 = vld [vmem:[%s4 + $0x18] sm:$0xff]
      %v425 = vld [vmem:[%s5] sm:$0xff]
      %v426 = vld [vmem:[%s5 + $0x8] sm:$0xff]
      %v427 = vld [vmem:[%s5 + $0x10] sm:$0xff]
      %v428 = vld [vmem:[%s5 + $0x18] sm:$0xff]
      loop: start=0, step=1, limit=32
      $region45: #{tpu_custom_call.1} parent=43 // loop_pre_header
        _
      $region46: #{tpu_custom_call.1} parent=43 // loop_header
        %s430 = sphi 0, %s434
        %p431 = scmp.ge.s32.totalorder %s430, 32
      $region47: #{tpu_custom_call.1} parent=43 // loop_header_branch
        %433 = sbr.rel (%p431) target = $region51
      $region48: #{tpu_custom_call.1} parent=43 // loop_body
        %s435 = scalar_lea.vmem [#allocation2], %s430
        %v436 = vld [vmem:[%s435] sm:$0x1]
        %s437 = scalar_lea.vmem [#allocation3], %s430
        %v438 = vld [vmem:[%s437] sm:$0x1]
        %s439 = smul.u32 %s430, 32
        %s440 = scalar_lea.vmem %s272, %s439
        %v441 = vld [vmem:[%s440] sm:$0xff]
        %v442 = vld [vmem:[%s440 + $0x8] sm:$0xff]
        %v443 = vld [vmem:[%s440 + $0x10] sm:$0xff]
        %v444 = vld [vmem:[%s440 + $0x18] sm:$0xff]
        %v446 = vsel %vm295, %v421, 0
        %v449 = vsel %vm295, %v422, 0
        %v452 = vsel %vm295, %v423, 0
        %v455 = vsel %vm295, %v424, 0
        %457 = vmatprep.subr.mxu0 0.0
        %458 = vmatpush1.msra.mxu0 0.0
        %459 = vmatprep.subr.mxu0 0.0
        %460 = vmatpush1.msra.mxu0 0.0
        %461 = vmatprep.subr.mxu0 0.0
        %462 = vmatpush1.msra.mxu0 0.0
        %463 = vmatprep.subr.mxu0 0.0
        %464 = vmatpush1.msra.mxu0 0.0
        %465 = vmatprep.subr.mxu0 0.0
        %466 = vmatpush1.msra.mxu0 0.0
        %467 = vmatprep.subr.mxu0 0.0
        %468 = vmatpush1.msra.mxu0 0.0
        %469 = vmatprep.subr.mxu0 0.0
        %470 = vmatpush1.msra.mxu0 0.0
        %471 = vmatprep.subr.mxu0 0.0
        %472 = vmatpush1.msra.mxu0 0.0
        %473 = vmatprep.subr.mxu0 0.0
        %474 = vmatpush1.msra.mxu0 0.0
        %475 = vmatprep.subr.mxu0 0.0
        %476 = vmatpush1.msra.mxu0 0.0
        %477 = vmatprep.subr.mxu0 0.0
        %478 = vmatpush1.msra.mxu0 0.0
        %479 = vmatprep.subr.mxu0 0.0
        %480 = vmatpush1.msra.mxu0 0.0
        %481 = vmatprep.subr.mxu0 0.0
        %482 = vmatpush1.msra.mxu0 %v444
        %483 = vmatprep.subr.mxu0 0.0
        %484 = vmatpush1.msra.mxu0 %v443
        %485 = vmatprep.subr.mxu0 0.0
        %486 = vmatpush1.msra.mxu0 %v442
        %487 = vmatprep.subr.mxu0 0.0
        %488 = vmatpush1.msra.mxu0 %v441
        %489 = vmatprep.subr.mxu0 0.0
        %490 = vmatpush2.msra.mxu0 0.0
        %491 = vmatprep.subr.mxu0 0.0
        %492 = vmatpush2.msra.mxu0 0.0
        %493 = vmatprep.subr.mxu0 0.0
        %494 = vmatpush2.msra.mxu0 0.0
        %495 = vmatprep.subr.mxu0 0.0
        %496 = vmatpush2.msra.mxu0 0.0
        %497 = vmatprep.subr.mxu0 0.0
        %498 = vmatpush2.msra.mxu0 0.0
        %499 = vmatprep.subr.mxu0 0.0
        %500 = vmatpush2.msra.mxu0 0.0
        %501 = vmatprep.subr.mxu0 0.0
        %502 = vmatpush2.msra.mxu0 0.0
        %503 = vmatprep.subr.mxu0 0.0
        %504 = vmatpush2.msra.mxu0 0.0
        %505 = vmatprep.subr.mxu0 0.0
        %506 = vmatpush2.msra.mxu0 0.0
        %507 = vmatprep.subr.mxu0 0.0
        %508 = vmatpush2.msra.mxu0 0.0
        %509 = vmatprep.subr.mxu0 0.0
        %510 = vmatpush2.msra.mxu0 0.0
        %511 = vmatprep.subr.mxu0 0.0
        %512 = vmatpush2.msra.mxu0 0.0
        %513 = vmatprep.subr.mxu0 0.0
        %514 = vmatpush2.msra.mxu0 0.0
        %515 = vmatprep.subr.mxu0 0.0
        %516 = vmatpush2.msra.mxu0 0.0
        %517 = vmatprep.subr.mxu0 0.0
        %518 = vmatpush2.msra.mxu0 0.0
        %519 = vmatprep.subr.mxu0 0.0
        %520 = vmatpush2.msra.mxu0 0.0
        %521 = vmatprep.mubr.f32.mxu0 0.0
        %522 = vmatmul.mubr.f32.gmra.mxu0 %v446
        %v523 = vpop.f32.mrf.mxu0
        %v524 = vadd.f32 %v425, %v523
        %v525 = vpop.f32.mrf.mxu0
        %526 = vmatprep.mubr.f32.mxu0 0.0
        %527 = vmatmul.mubr.f32.gmra.mxu0 %v449
        %v528 = vpop.f32.mrf.mxu0
        %v529 = vadd.f32 %v426, %v528
        %v530 = vpop.f32.mrf.mxu0
        %531 = vmatprep.mubr.f32.mxu0 0.0
        %532 = vmatmul.mubr.f32.gmra.mxu0 %v452
        %v533 = vpop.f32.mrf.mxu0
        %v534 = vadd.f32 %v427, %v533
        %v535 = vpop.f32.mrf.mxu0
        %536 = vmatprep.mubr.f32.mxu0 0.0
        %537 = vmatmul.mubr.f32.gmra.mxu0 %v455
        %v538 = vpop.f32.mrf.mxu0
        %v539 = vadd.f32 %v428, %v538
        %v540 = vpop.f32.mrf.mxu0
        %541 = vdwg.mxu0
        %543 = vset.pattern.permute.xlu0 0
        %544 = vperm.xlu0 %543, %v524
        %v545 = vpop.permute.xlu0 %544
        %548 = vset.pattern.permute.xlu0 0
        %549 = vperm.xlu0 %548, %v529
        %v550 = vpop.permute.xlu0 %549
        %553 = vset.pattern.permute.xlu0 0
        %554 = vperm.xlu0 %553, %v534
        %v555 = vpop.permute.xlu0 %554
        %558 = vset.pattern.permute.xlu0 0
        %559 = vperm.xlu0 %558, %v539
        %v560 = vpop.permute.xlu0 %559
        %v562 = vlaneseq
        %v563 = vshrl.u32 %v562, 7
        %v564 = vsub.s32 0, %v563
        %v565 = vrot.slane %v436, %v564
        %v566 = vmul.f32 %v545, %v565
        %v567 = vmul.f32 %v550, %v565
        %v568 = vmul.f32 %v555, %v565
        %v569 = vmul.f32 %v560, %v565
        %v570 = vsel %vm295, %v566, -inf
        %v571 = vsel %vm295, %v567, -inf
        %v572 = vsel %vm295, %v568, -inf
        %v573 = vsel %vm295, %v569, -inf
        %v574 = vmax.f32 %v570, %v571
        %v575 = vmax.f32 %v572, %v573
        %v576 = vmax.f32 %v574, %v575
        %v577 = vrot.slane %v576, 4
        %v578 = vmax.f32 %v576, %v577
        %v579 = vrot.slane %v578, 2
        %v580 = vmax.f32 %v578, %v579
        %v581 = vrot.slane %v580, 1
        %v582 = vmax.f32 %v580, %v581
        %v583 = vsub.f32 %v566, %v582
        %v584 = vsub.f32 %v567, %v582
        %v585 = vsub.f32 %v568, %v582
        %v586 = vsub.f32 %v569, %v582
        %v587 = vmul.f32 %v583, 1.442695
        %v588 = vpow.pop %v587
        %v589 = vmul.f32 %v584, 1.442695
        %v590 = vpow.pop %v589
        %v591 = vmul.f32 %v585, 1.442695
        %v592 = vpow.pop %v591
        %v593 = vmul.f32 %v586, 1.442695
        %v594 = vpow.pop %v593
        %v595 = vsel %vm295, %v588, 0.0
        %v596 = vsel %vm295, %v590, 0.0
        %v597 = vadd.f32 %v595, %v596
        %v598 = vsel %vm295, %v592, 0.0
        %v599 = vadd.f32 %v597, %v598
        %v600 = vsel %vm295, %v594, 0.0
        %v601 = vadd.f32 %v599, %v600
        %v602 = vrot.slane %v601, 4
        %v603 = vadd.f32 %v601, %v602
        %v604 = vrot.slane %v603, 2
        %v605 = vadd.f32 %v603, %v604
        %v606 = vrot.slane %v605, 1
        %v607 = vadd.f32 %v605, %v606
        %v609 = vsel %vm295, %v438, 0
        %611 = vmatprep.subr.mxu0 0.0
        %612 = vmatpush1.msra.mxu0 0.0
        %613 = vmatprep.subr.mxu0 0.0
        %614 = vmatpush1.msra.mxu0 0.0
        %615 = vmatprep.subr.mxu0 0.0
        %616 = vmatpush1.msra.mxu0 0.0
        %617 = vmatprep.subr.mxu0 0.0
        %618 = vmatpush1.msra.mxu0 0.0
        %619 = vmatprep.subr.mxu0 0.0
        %620 = vmatpush1.msra.mxu0 0.0
        %621 = vmatprep.subr.mxu0 0.0
        %622 = vmatpush1.msra.mxu0 0.0
        %623 = vmatprep.subr.mxu0 0.0
        %624 = vmatpush1.msra.mxu0 0.0
        %625 = vmatprep.subr.mxu0 0.0
        %626 = vmatpush1.msra.mxu0 0.0
        %627 = vmatprep.subr.mxu0 0.0
        %628 = vmatpush1.msra.mxu0 0.0
        %629 = vmatprep.subr.mxu0 0.0
        %630 = vmatpush1.msra.mxu0 0.0
        %631 = vmatprep.subr.mxu0 0.0
        %632 = vmatpush1.msra.mxu0 0.0
        %633 = vmatprep.subr.mxu0 0.0
        %634 = vmatpush1.msra.mxu0 0.0
        %635 = vmatprep.subr.mxu0 0.0
        %636 = vmatpush1.msra.mxu0 %v594
        %637 = vmatprep.subr.mxu0 0.0
        %638 = vmatpush1.msra.mxu0 %v592
        %639 = vmatprep.subr.mxu0 0.0
        %640 = vmatpush1.msra.mxu0 %v590
        %641 = vmatprep.subr.mxu0 0.0
        %642 = vmatpush1.msra.mxu0 %v588
        %643 = vmatprep.subr.mxu0 0.0
        %644 = vmatpush2.msra.mxu0 0.0
        %645 = vmatprep.subr.mxu0 0.0
        %646 = vmatpush2.msra.mxu0 0.0
        %647 = vmatprep.subr.mxu0 0.0
        %648 = vmatpush2.msra.mxu0 0.0
        %649 = vmatprep.subr.mxu0 0.0
        %650 = vmatpush2.msra.mxu0 0.0
        %651 = vmatprep.subr.mxu0 0.0
        %652 = vmatpush2.msra.mxu0 0.0
        %653 = vmatprep.subr.mxu0 0.0
        %654 = vmatpush2.msra.mxu0 0.0
        %655 = vmatprep.subr.mxu0 0.0
        %656 = vmatpush2.msra.mxu0 0.0
        %657 = vmatprep.subr.mxu0 0.0
        %658 = vmatpush2.msra.mxu0 0.0
        %659 = vmatprep.subr.mxu0 0.0
        %660 = vmatpush2.msra.mxu0 0.0
        %661 = vmatprep.subr.mxu0 0.0
        %662 = vmatpush2.msra.mxu0 0.0
        %663 = vmatprep.subr.mxu0 0.0
        %664 = vmatpush2.msra.mxu0 0.0
        %665 = vmatprep.subr.mxu0 0.0
        %666 = vmatpush2.msra.mxu0 0.0
        %667 = vmatprep.subr.mxu0 0.0
        %668 = vmatpush2.msra.mxu0 0.0
        %669 = vmatprep.subr.mxu0 0.0
        %670 = vmatpush2.msra.mxu0 0.0
        %671 = vmatprep.subr.mxu0 0.0
        %672 = vmatpush2.msra.mxu0 0.0
        %673 = vmatprep.subr.mxu0 0.0
        %674 = vmatpush2.msra.mxu0 0.0
        %675 = vmatprep.mubr.f32.mxu0 0.0
        %676 = vmatmul.mubr.f32.gmra.mxu0 %v609
        %v677 = vpop.f32.mrf.mxu0
        %v678 = vadd.f32 0.0, %v677
        %v679 = vpop.f32.mrf.mxu0
        %680 = vdwg.mxu0
        %v681 = vrcp.pop %v607
        %v682 = vmul.f32 %v607, %v681
        %v683 = vsub.f32 2.0, %v682
        %v684 = vmul.f32 %v681, %v683
        %v685 = vmul.f32 %v678, %v684
        %s686 = scalar_lea.vmem %s278, %s430
        %vm687 = vcmask 253952
        %688 = vst.msk [vmem:[%s686] sm:$0x1] %vm687, %v685
      $region49: #{tpu_custom_call.1} parent=43 // loop_footer
        %s434 = sadd.s32 1, %s430
      $region50: #{tpu_custom_call.1} parent=43 // loop_footer_branch
        %429 = sbr.rel target = $region46
      $region51: #{tpu_custom_call.1} parent=43 // loop_exit
        _
      %s689 = smul.u32 4, %s17
      %p690 = scmp.lt.s32.totalorder %s689, 7
      %s691 = scalar_select %p690, %s689, 7
      %s692 = smul.addr %s691, 8
      %s693 = scalar_lea.vmem %s6, %s692
      // Predicated region
      $region52: #{tpu_custom_call.1} parent=43 // pred_check
        %p694 = pneg %p171
      $region53: #{tpu_custom_call.1} parent=43 // pred_check_branch
        %696 = sbr.rel (%p694) target = $region55
      $region54: #{tpu_custom_call.1} parent=43 // pred_region
        %s697 = smul.u32 4, %s17
      $region55: #{tpu_custom_call.1} parent=43 // pred_fallthru
        _
    $region44: #{tpu_custom_call.1} parent=5 // pred_fallthru
      _
    %p698 = scmp.le.s32.totalorder 2, %s12
    // Predicated region
    $region56: #{tpu_custom_call.1} parent=5 // pred_check
      %p699 = pneg %p698
    $region57: #{tpu_custom_call.1} parent=5 // pred_check_branch
      %701 = sbr.rel (%p699) target = $region59
    $region58: #{tpu_custom_call.1} parent=5 // pred_region
      %s702 = ssub.s32 %s12, 2
      // Predicated region
      $region60: #{tpu_custom_call.1} parent=58 // pred_check
        %p703 = pneg %p177
      $region61: #{tpu_custom_call.1} parent=58 // pred_check_branch
        %705 = sbr.rel (%p703) target = $region63
      $region62: #{tpu_custom_call.1} parent=58 // pred_region
        %s706 = smul.u32 4, %s18
        %p707 = scmp.lt.s32.totalorder %s706, 7
        %s708 = scalar_select %p707, %s706, 7
        %s709 = smul.addr %s708, 8
        %s710 = scalar_lea.vmem %s6, %s709
      $region63: #{tpu_custom_call.1} parent=58 // pred_fallthru
        _
    $region59: #{tpu_custom_call.1} parent=5 // pred_fallthru
      _
  $region6: #{tpu_custom_call.1} parent=0 // loop_footer
    %s16 = sadd.s32 1, %s12
  $region7: #{tpu_custom_call.1} parent=0 // loop_footer_branch
    %11 = sbr.rel target = $region3
  $region8: #{tpu_custom_call.1} parent=0 // loop_exit
    _

</llo_original>
